<compile_context>
chip_gen: v7x
topology: tpu7x:2x2x1
jax: 0.10.0
libtpu: 0.0.40
codegen_flags: <defaults>
</compile_context>

<pallas_src>
import functools

import jax
import jax.numpy as jnp
from jax.experimental import pallas as pl
from jax.experimental.pallas import tpu as pltpu

_LANE = 128     # lane width: feature dims padded to a multiple of this
_SUBLANE = 8    # f32 sublane width: batch tiles padded to a multiple of this


def _round_up(x, m):
    return (x + m - 1) // m * m


def _fused_mlp_kernel(*refs, activations):
    """Fused MLP on one batch tile: refs = (x_ref, w0, b0, w1, b1, ..., o_ref).

    Activations stay in VMEM (vregs) between layers; each matmul is bf16 on the
    MXU with f32 accumulation, bias/activation math in f32.
    """
    num_layers = len(activations)
    x_ref = refs[0]
    o_ref = refs[-1]
    wb = refs[1:-1]

    h = x_ref[...]                                    # (TB, D0_pad) f32
    for l in range(num_layers):
        w = wb[2 * l][...]                            # (Dl_pad, Dl1_pad) bf16
        b = wb[2 * l + 1][...]                        # (1, Dl1_pad) f32
        y = jnp.dot(h.astype(w.dtype), w,
                    preferred_element_type=jnp.float32) + b
        act = activations[l]
        if act == "relu":
            y = jnp.maximum(y, 0.0)
        elif act == "tanh":
            y = jnp.tanh(y)
        elif act == "sigmoid":
            y = jax.nn.sigmoid(y)
        elif act in (None, "linear"):
            pass
        else:
            raise ValueError(f"unknown activation: {act!r}")
        h = y
    o_ref[...] = h.astype(o_ref.dtype)


def siamese_net_forward(data_batch, params, *, block_b=None,
                        compute_dtype=jnp.bfloat16):
    """Forward pass of SiameseNet as one fused Pallas kernel.

    data_batch: (B, D_in) array.
    params: list of (W (D_in, D_out), b (D_out,), activation).
    """
    B, d_in = data_batch.shape
    dims = [d_in] + [w.shape[1] for (w, _, _) in params]
    dims_pad = [_round_up(d, _LANE) for d in dims]
    activations = tuple(act for (_, _, act) in params)

    if block_b is None:
        # Big tiles when the batch allows (pipelining + v7x dual-TC sharding),
        # otherwise a single sublane-aligned tile.
        block_b = min(256, _round_up(B, _SUBLANE))
    b_pad_total = _round_up(B, block_b)

    # Zero-pad the activations to a lane-dense slab. Padded lanes/rows are zero
    # and all padded weight rows/cols & bias lanes are zero, so real outputs
    # are unaffected; the slice at the end discards the padding.
    x_pad = jnp.zeros((b_pad_total, dims_pad[0]), jnp.float32)
    x_pad = x_pad.at[:B, :d_in].set(data_batch.astype(jnp.float32))

    flat_inputs = [x_pad]
    in_specs = [pl.BlockSpec((block_b, dims_pad[0]), lambda i: (i, 0))]
    for l, (w, b, _) in enumerate(params):
        di, do = dims[l], dims[l + 1]
        dip, dop = dims_pad[l], dims_pad[l + 1]
        w_pad = jnp.zeros((dip, dop), compute_dtype)
        w_pad = w_pad.at[:di, :do].set(w.astype(compute_dtype))
        b_pad = jnp.zeros((1, dop), jnp.float32)
        b_pad = b_pad.at[0, :do].set(b.astype(jnp.float32))
        flat_inputs += [w_pad, b_pad]
        in_specs += [
            # Weights/biases resident for every batch tile (constant index_map).
            pl.BlockSpec((dip, dop), lambda i: (0, 0)),
            pl.BlockSpec((1, dop), lambda i: (0, 0)),
        ]

    # VMEM budget sanity check (v7x has only 64 MiB / TC).
    resident_bytes = sum(int(a.size) * a.dtype.itemsize for a in flat_inputs[1:])
    act_bytes = 2 * 2 * block_b * max(dims_pad) * 4  # in/out tiles, double-buffered
    # TODO(synk): if the weight stack outgrows ~24-32 MiB, stream weights per
    # layer (K/N-tiled inner loop) instead of keeping all layers VMEM-resident.
    assert resident_bytes + act_bytes < 48 * 2**20, (
        "fused weight stack too large to keep VMEM-resident")

    kernel = functools.partial(_fused_mlp_kernel, activations=activations)
    out_pad = pl.pallas_call(
        kernel,
        out_shape=jax.ShapeDtypeStruct((b_pad_total, dims_pad[-1]), jnp.float32),
        grid=(b_pad_total // block_b,),
        in_specs=in_specs,
        out_specs=pl.BlockSpec((block_b, dims_pad[-1]), lambda i: (i, 0)),
        compiler_params=pltpu.CompilerParams(
            dimension_semantics=("parallel",),
        ),
    )(*flat_inputs)

    return out_pad[:B, :dims[-1]]


def siamese_net_forward_pair(x1, x2, params):
    """True Siamese usage: both branches share weights, so run them through the
    network in a single launch (concatenate along batch, split afterwards)."""
    out = siamese_net_forward(jnp.concatenate([x1, x2], axis=0), params)
    n1 = x1.shape[0]
    return out[:n1], out[n1:]


def init_params(key, in_dim, arch):
    """PyTorch-nn.Linear-style init: U(-1/sqrt(fan_in), 1/sqrt(fan_in)).

    arch: list of {'layer': 'linear', 'size': int, 'activation': str|None}
    Returns list of (W (D_in, D_out), b (D_out,), activation).
    """
    params = []
    d_in = in_dim
    for spec in arch:
        assert spec["layer"] == "linear"
        d_out = spec["size"]
        key, kw, kb = jax.random.split(key, 3)
        bound = 1.0 / jnp.sqrt(jnp.float32(d_in))
        # PyTorch stores weight as (out, in); we keep (in, out) for the kernel.
        w = jax.random.uniform(kw, (d_in, d_out), jnp.float32, -bound, bound)
        b = jax.random.uniform(kb, (d_out,), jnp.float32, -bound, bound)
        params.append((w, b, spec.get("activation", None)))
        d_in = d_out
    return params


def _reference_forward(data_batch, params, compute_dtype=jnp.bfloat16):
    """Pure-JAX reference that mirrors the kernel's dtype flow exactly."""
    h = data_batch.astype(jnp.float32)
    for w, b, act in params:
        h = jnp.dot(h.astype(compute_dtype), w.astype(compute_dtype),
                    preferred_element_type=jnp.float32) + b.astype(jnp.float32)
        if act == "relu":
            h = jnp.maximum(h, 0.0)
        elif act == "tanh":
            h = jnp.tanh(h)
        elif act == "sigmoid":
            h = jax.nn.sigmoid(h)
    return h


if __name__ == "__main__":
    key = jax.random.PRNGKey(0)

    # Small shapes consistent with the module: a batch of vectors.
    batch = 8
    in_dim = 32
    arch = [
        {"layer": "linear", "size": 64, "activation": "relu"},
        {"layer": "linear", "size": 64, "activation": "tanh"},
        {"layer": "linear", "size": 32, "activation": "sigmoid"},
        {"layer": "linear", "size": 16, "activation": None},
    ]

    key, kx, kp = jax.random.split(key, 3)
    data_batch = jax.random.normal(kx, (batch, in_dim), jnp.float32)
    params = init_params(kp, in_dim, arch)

    out = siamese_net_forward(data_batch, params)
    out = jax.block_until_ready(out)

    ref = _reference_forward(data_batch, params)
    assert out.shape == (batch, arch[-1]["size"])
    assert jnp.allclose(out, ref, atol=2e-2, rtol=2e-2), (
        float(jnp.max(jnp.abs(out - ref))))

    # Shared-weight Siamese pair path (one launch for both branches).
    o1, o2 = siamese_net_forward_pair(data_batch, data_batch, params)
    o1, o2 = jax.block_until_ready((o1, o2))
    assert o1.shape == o2.shape == (batch, arch[-1]["size"])
    assert jnp.allclose(o1, o2, atol=1e-6)

    print("KERNEL_OK")
</pallas_src>

<mosaic_0001>
module attributes {stable_mosaic.version = 11 : i64} {
  func.func @_fused_mlp_kernel(%arg0: i32, %arg1: memref<8x128xf32, #tpu.memory_space<vmem>>, %arg2: memref<128x128xbf16, #tpu.memory_space<vmem>>, %arg3: memref<1x128xf32, #tpu.memory_space<vmem>>, %arg4: memref<128x128xbf16, #tpu.memory_space<vmem>>, %arg5: memref<1x128xf32, #tpu.memory_space<vmem>>, %arg6: memref<128x128xbf16, #tpu.memory_space<vmem>>, %arg7: memref<1x128xf32, #tpu.memory_space<vmem>>, %arg8: memref<128x128xbf16, #tpu.memory_space<vmem>>, %arg9: memref<1x128xf32, #tpu.memory_space<vmem>>, %arg10: memref<8x128xf32, #tpu.memory_space<vmem>>) attributes {dimension_semantics = [#tpu.dimension_semantics<parallel>], iteration_bounds = array<i64: 1>, scalar_prefetch = 0 : i64, scratch_operands = 0 : i64, tpu.core_type = #tpu.core_type<tc>, window_params = [{transform_indices = @transform_0, window_bounds = array<i64: 8, 128>}, {pipeline_mode = #tpu.pipeline_mode<synchronous>, transform_indices = @transform_1, window_bounds = array<i64: 128, 128>}, {pipeline_mode = #tpu.pipeline_mode<synchronous>, transform_indices = @transform_2, window_bounds = array<i64: 1, 128>}, {pipeline_mode = #tpu.pipeline_mode<synchronous>, transform_indices = @transform_3, window_bounds = array<i64: 128, 128>}, {pipeline_mode = #tpu.pipeline_mode<synchronous>, transform_indices = @transform_4, window_bounds = array<i64: 1, 128>}, {pipeline_mode = #tpu.pipeline_mode<synchronous>, transform_indices = @transform_5, window_bounds = array<i64: 128, 128>}, {pipeline_mode = #tpu.pipeline_mode<synchronous>, transform_indices = @transform_6, window_bounds = array<i64: 1, 128>}, {pipeline_mode = #tpu.pipeline_mode<synchronous>, transform_indices = @transform_7, window_bounds = array<i64: 128, 128>}, {pipeline_mode = #tpu.pipeline_mode<synchronous>, transform_indices = @transform_8, window_bounds = array<i64: 1, 128>}, {transform_indices = @transform_9, window_bounds = array<i64: 8, 128>}]} {
    %c0 = arith.constant 0 : index
    %c0_0 = arith.constant 0 : index
    %0 = vector.load %arg1[%c0, %c0_0] : memref<8x128xf32, #tpu.memory_space<vmem>>, vector<8x128xf32>
    %c0_1 = arith.constant 0 : index
    %c0_2 = arith.constant 0 : index
    %1 = vector.load %arg2[%c0_1, %c0_2] : memref<128x128xbf16, #tpu.memory_space<vmem>>, vector<128x128xbf16>
    %c0_3 = arith.constant 0 : index
    %c0_4 = arith.constant 0 : index
    %2 = vector.load %arg3[%c0_3, %c0_4] : memref<1x128xf32, #tpu.memory_space<vmem>>, vector<1x128xf32>
    %3 = arith.truncf %0 : vector<8x128xf32> to vector<8x128xbf16>
    %cst = arith.constant dense<0.000000e+00> : vector<8x128xf32>
    %4 = tpu.matmul %3, %1, %cst {dimension_numbers = #tpu.dot_dimension_numbers<[1], [0], [0], [1], [0, 0, 1, 1], [], []>} : vector<8x128xbf16>, vector<128x128xbf16>, vector<8x128xf32> -> vector<8x128xf32>
    %5 = vector.broadcast %2 : vector<1x128xf32> to vector<8x128xf32>
    %6 = arith.addf %4, %5 : vector<8x128xf32>
    %cst_5 = arith.constant 0.000000e+00 : f32
    %7 = vector.broadcast %cst_5 : f32 to vector<8x128xf32>
    %8 = arith.maximumf %6, %7 : vector<8x128xf32>
    %c0_6 = arith.constant 0 : index
    %c0_7 = arith.constant 0 : index
    %9 = vector.load %arg4[%c0_6, %c0_7] : memref<128x128xbf16, #tpu.memory_space<vmem>>, vector<128x128xbf16>
    %c0_8 = arith.constant 0 : index
    %c0_9 = arith.constant 0 : index
    %10 = vector.load %arg5[%c0_8, %c0_9] : memref<1x128xf32, #tpu.memory_space<vmem>>, vector<1x128xf32>
    %11 = arith.truncf %8 : vector<8x128xf32> to vector<8x128xbf16>
    %cst_10 = arith.constant dense<0.000000e+00> : vector<8x128xf32>
    %12 = tpu.matmul %11, %9, %cst_10 {dimension_numbers = #tpu.dot_dimension_numbers<[1], [0], [0], [1], [0, 0, 1, 1], [], []>} : vector<8x128xbf16>, vector<128x128xbf16>, vector<8x128xf32> -> vector<8x128xf32>
    %13 = vector.broadcast %10 : vector<1x128xf32> to vector<8x128xf32>
    %14 = arith.addf %12, %13 : vector<8x128xf32>
    %15 = math.tanh %14 : vector<8x128xf32>
    %c0_11 = arith.constant 0 : index
    %c0_12 = arith.constant 0 : index
    %16 = vector.load %arg6[%c0_11, %c0_12] : memref<128x128xbf16, #tpu.memory_space<vmem>>, vector<128x128xbf16>
    %c0_13 = arith.constant 0 : index
    %c0_14 = arith.constant 0 : index
    %17 = vector.load %arg7[%c0_13, %c0_14] : memref<1x128xf32, #tpu.memory_space<vmem>>, vector<1x128xf32>
    %18 = arith.truncf %15 : vector<8x128xf32> to vector<8x128xbf16>
    %cst_15 = arith.constant dense<0.000000e+00> : vector<8x128xf32>
    %19 = tpu.matmul %18, %16, %cst_15 {dimension_numbers = #tpu.dot_dimension_numbers<[1], [0], [0], [1], [0, 0, 1, 1], [], []>} : vector<8x128xbf16>, vector<128x128xbf16>, vector<8x128xf32> -> vector<8x128xf32>
    %20 = vector.broadcast %17 : vector<1x128xf32> to vector<8x128xf32>
    %21 = arith.addf %19, %20 : vector<8x128xf32>
    %22 = arith.negf %21 : vector<8x128xf32>
    %23 = math.exp %22 : vector<8x128xf32>
    %cst_16 = arith.constant 1.000000e+00 : f32
    %24 = vector.broadcast %cst_16 : f32 to vector<8x128xf32>
    %25 = arith.addf %24, %23 : vector<8x128xf32>
    %26 = arith.divf %24, %25 : vector<8x128xf32>
    %c0_17 = arith.constant 0 : index
    %c0_18 = arith.constant 0 : index
    %27 = vector.load %arg8[%c0_17, %c0_18] : memref<128x128xbf16, #tpu.memory_space<vmem>>, vector<128x128xbf16>
    %c0_19 = arith.constant 0 : index
    %c0_20 = arith.constant 0 : index
    %28 = vector.load %arg9[%c0_19, %c0_20] : memref<1x128xf32, #tpu.memory_space<vmem>>, vector<1x128xf32>
    %29 = arith.truncf %26 : vector<8x128xf32> to vector<8x128xbf16>
    %cst_21 = arith.constant dense<0.000000e+00> : vector<8x128xf32>
    %30 = tpu.matmul %29, %27, %cst_21 {dimension_numbers = #tpu.dot_dimension_numbers<[1], [0], [0], [1], [0, 0, 1, 1], [], []>} : vector<8x128xbf16>, vector<128x128xbf16>, vector<8x128xf32> -> vector<8x128xf32>
    %31 = vector.broadcast %28 : vector<1x128xf32> to vector<8x128xf32>
    %32 = arith.addf %30, %31 : vector<8x128xf32>
    %c0_22 = arith.constant 0 : index
    %c0_23 = arith.constant 0 : index
    %33 = vector.load %arg10[%c0_22, %c0_23] : memref<8x128xf32, #tpu.memory_space<vmem>>, vector<8x128xf32>
    tpu.vector_store %arg10[%c0_22, %c0_23], %32 {strides = array<i32>} : memref<8x128xf32, #tpu.memory_space<vmem>>, vector<8x128xf32>,
    return
  }
  func.func @transform_0(%arg0: i32) -> (i32, i32) {
    %c0_i32 = arith.constant 0 : i32
    %c0_i32_0 = arith.constant 0 : i32
    return %arg0, %c0_i32 : i32, i32
  }
  func.func @transform_1(%arg0: i32) -> (i32, i32) {
    %c0_i32 = arith.constant 0 : i32
    %c0_i32_0 = arith.constant 0 : i32
    %c0_i32_1 = arith.constant 0 : i32
    return %c0_i32, %c0_i32_0 : i32, i32
  }
  func.func @transform_2(%arg0: i32) -> (i32, i32) {
    %c0_i32 = arith.constant 0 : i32
    %c0_i32_0 = arith.constant 0 : i32
    %c0_i32_1 = arith.constant 0 : i32
    return %c0_i32, %c0_i32_0 : i32, i32
  }
  func.func @transform_3(%arg0: i32) -> (i32, i32) {
    %c0_i32 = arith.constant 0 : i32
    %c0_i32_0 = arith.constant 0 : i32
    %c0_i32_1 = arith.constant 0 : i32
    return %c0_i32, %c0_i32_0 : i32, i32
  }
  func.func @transform_4(%arg0: i32) -> (i32, i32) {
    %c0_i32 = arith.constant 0 : i32
    %c0_i32_0 = arith.constant 0 : i32
    %c0_i32_1 = arith.constant 0 : i32
    return %c0_i32, %c0_i32_0 : i32, i32
  }
  func.func @transform_5(%arg0: i32) -> (i32, i32) {
    %c0_i32 = arith.constant 0 : i32
    %c0_i32_0 = arith.constant 0 : i32
    %c0_i32_1 = arith.constant 0 : i32
    return %c0_i32, %c0_i32_0 : i32, i32
  }
  func.func @transform_6(%arg0: i32) -> (i32, i32) {
    %c0_i32 = arith.constant 0 : i32
    %c0_i32_0 = arith.constant 0 : i32
    %c0_i32_1 = arith.constant 0 : i32
    return %c0_i32, %c0_i32_0 : i32, i32
  }
  func.func @transform_7(%arg0: i32) -> (i32, i32) {
    %c0_i32 = arith.constant 0 : i32
    %c0_i32_0 = arith.constant 0 : i32
    %c0_i32_1 = arith.constant 0 : i32
    return %c0_i32, %c0_i32_0 : i32, i32
  }
  func.func @transform_8(%arg0: i32) -> (i32, i32) {
    %c0_i32 = arith.constant 0 : i32
    %c0_i32_0 = arith.constant 0 : i32
    %c0_i32_1 = arith.constant 0 : i32
    return %c0_i32, %c0_i32_0 : i32, i32
  }
  func.func @transform_9(%arg0: i32) -> (i32, i32) {
    %c0_i32 = arith.constant 0 : i32
    %c0_i32_0 = arith.constant 0 : i32
    return %arg0, %c0_i32 : i32, i32
  }
}

</mosaic_0001>

<llo_original>
// kernel: tpu_custom_call.1
$region0: #{tpu_custom_call.1}
  #allocation0 [shape = 'u32[]', space=smem, size = 0x4, offset = 0x4, fixed_abs, tag = 'smem constant byte address 0x4 - core index']
  #allocation1 [shape = 'u32[144,128]{1,0:T(1,128)}', space=vmem, size = 0x12000, scoped, tag = 'internal scratch']
  %s0 = inlined_call_operand.hbm [shape: f32[8,128], index: 0, kind: input, shape index: {}]
  %s1 = inlined_call_operand.hbm [shape: bf16[128,128], index: 1, kind: input, shape index: {}]
  %s2 = inlined_call_operand.vmem [shape: f32[1,128], index: 2, kind: input, shape index: {}]
  %s3 = inlined_call_operand.hbm [shape: bf16[128,128], index: 3, kind: input, shape index: {}]
  %s4 = inlined_call_operand.vmem [shape: f32[1,128], index: 4, kind: input, shape index: {}]
  %s5 = inlined_call_operand.hbm [shape: bf16[128,128], index: 5, kind: input, shape index: {}]
  %s6 = inlined_call_operand.vmem [shape: f32[1,128], index: 6, kind: input, shape index: {}]
  %s7 = inlined_call_operand.hbm [shape: bf16[128,128], index: 7, kind: input, shape index: {}]
  %s8 = inlined_call_operand.vmem [shape: f32[1,128], index: 8, kind: input, shape index: {}]
  %s9 = inlined_call_operand.hbm [shape: f32[8,128], index: 9, kind: output, shape index: {}]
  %s10 = sld [smem:[#allocation0]]
  $region66: #{tpu_custom_call.1} parent=0
    _
  %s12 = ssub.s32 1, %s10
  %s13 = scalar_select 0, %s12, %s10
  $region1: #{tpu_custom_call.1} parent=0
    #allocation2 [shape = 'u8[4096]{0}', space=vmem, size = 0x1000, scoped, tag = 'input window, operand 0, single buffered']
    #allocation3 [shape = 's32[1]{0}', space=sflag, size = 0x4, scoped, tag = 'scoped memory for tpu_custom_call.1']
    #allocation4 [shape = 's32[1]{0}', space=sflag, size = 0x4, scoped, tag = 'scoped memory for tpu_custom_call.1']
    #allocation5 [shape = 'u8[32768]{0}', space=vmem, size = 0x8000, scoped, tag = 'input window, operand 1, single buffered']
    #allocation6 [shape = 's32[1]{0}', space=sflag, size = 0x4, scoped, tag = 'scoped memory for tpu_custom_call.1']
    #allocation7 [shape = 'u8[32768]{0}', space=vmem, size = 0x8000, scoped, tag = 'input window, operand 3, single buffered']
    #allocation8 [shape = 'u8[32768]{0}', space=vmem, size = 0x8000, scoped, tag = 'input window, operand 5, single buffered']
    #allocation9 [shape = 's32[1]{0}', space=sflag, size = 0x4, scoped, tag = 'scoped memory for tpu_custom_call.1']
    #allocation10 [shape = 'u8[32768]{0}', space=vmem, size = 0x8000, scoped, tag = 'input window, operand 7, single buffered']
    #allocation11 [shape = 'u8[4096]{0}', space=vmem, size = 0x1000, scoped, tag = 'output window, operand 0, single buffered']
    %14 = vsyncpa [#allocation3], 0
    %15 = vsyncpa [#allocation6], 0
    %16 = vsyncpa [#allocation9], 0
    %17 = vsyncpa [#allocation4], 0
    // Predicated region
    $region2: #{tpu_custom_call.1} parent=1 // pred_check
      _
    $region3: #{tpu_custom_call.1} parent=1 // pred_check_branch
      %19 = sbr.rel (0) target = $region5
    $region4: #{tpu_custom_call.1} parent=1 // pred_region
      %s21 = ssub.s32 128, 128
      %22 = vsyncadd [#allocation3], %s21
      %s24 = sshll.u32 [#allocation2], 4
      %s25 = int_to_ptr.vmem [resolvable:$true] %s24
      %27 = dma.hbm_to_vmem [thread:$0]  %s0, 128, %s25, [#allocation3]
    $region5: #{tpu_custom_call.1} parent=1 // pred_fallthru
      _
    // Predicated region
    $region6: #{tpu_custom_call.1} parent=1 // pred_check
      _
    $region7: #{tpu_custom_call.1} parent=1 // pred_check_branch
      %29 = sbr.rel (0) target = $region9
    $region8: #{tpu_custom_call.1} parent=1 // pred_region
      %s31 = ssub.s32 1024, 1024
      %32 = vsyncadd [#allocation6], %s31
      %s33 = sshll.u32 [#allocation5], 4
      %s34 = int_to_ptr.vmem [resolvable:$true] %s33
      %39 = dma.hbm_to_vmem [thread:$0]  %s1, 1024, %s34, [#allocation6], 64, 64, 4
    $region9: #{tpu_custom_call.1} parent=1 // pred_fallthru
      _
    // Predicated region
    $region10: #{tpu_custom_call.1} parent=1 // pred_check
      _
    $region11: #{tpu_custom_call.1} parent=1 // pred_check_branch
      %41 = sbr.rel (0) target = $region13
    $region12: #{tpu_custom_call.1} parent=1 // pred_region
      _
    $region13: #{tpu_custom_call.1} parent=1 // pred_fallthru
      _
    // Predicated region
    $region14: #{tpu_custom_call.1} parent=1 // pred_check
      _
    $region15: #{tpu_custom_call.1} parent=1 // pred_check_branch
      %43 = sbr.rel (0) target = $region17
    $region16: #{tpu_custom_call.1} parent=1 // pred_region
      %s45 = ssub.s32 1024, 1024
      %46 = vsyncadd [#allocation6], %s45
      %s47 = sshll.u32 [#allocation7], 4
      %s48 = int_to_ptr.vmem [resolvable:$true] %s47
      %53 = dma.hbm_to_vmem [thread:$0]  %s3, 1024, %s48, [#allocation6], 64, 64, 4
    $region17: #{tpu_custom_call.1} parent=1 // pred_fallthru
      _
    // Predicated region
    $region18: #{tpu_custom_call.1} parent=1 // pred_check
      _
    $region19: #{tpu_custom_call.1} parent=1 // pred_check_branch
      %55 = sbr.rel (0) target = $region21
    $region20: #{tpu_custom_call.1} parent=1 // pred_region
      _
    $region21: #{tpu_custom_call.1} parent=1 // pred_fallthru
      _
    // Predicated region
    $region22: #{tpu_custom_call.1} parent=1 // pred_check
      _
    $region23: #{tpu_custom_call.1} parent=1 // pred_check_branch
      %57 = sbr.rel (0) target = $region25
    $region24: #{tpu_custom_call.1} parent=1 // pred_region
      %s59 = ssub.s32 1024, 1024
      %60 = vsyncadd [#allocation9], %s59
      %s61 = sshll.u32 [#allocation8], 4
      %s62 = int_to_ptr.vmem [resolvable:$true] %s61
      %67 = dma.hbm_to_vmem [thread:$0]  %s5, 1024, %s62, [#allocation9], 64, 64, 4
    $region25: #{tpu_custom_call.1} parent=1 // pred_fallthru
      _
    // Predicated region
    $region26: #{tpu_custom_call.1} parent=1 // pred_check
      _
    $region27: #{tpu_custom_call.1} parent=1 // pred_check_branch
      %69 = sbr.rel (0) target = $region29
    $region28: #{tpu_custom_call.1} parent=1 // pred_region
      _
    $region29: #{tpu_custom_call.1} parent=1 // pred_fallthru
      _
    // Predicated region
    $region30: #{tpu_custom_call.1} parent=1 // pred_check
      _
    $region31: #{tpu_custom_call.1} parent=1 // pred_check_branch
      %71 = sbr.rel (0) target = $region33
    $region32: #{tpu_custom_call.1} parent=1 // pred_region
      %s73 = ssub.s32 1024, 1024
      %74 = vsyncadd [#allocation9], %s73
      %s75 = sshll.u32 [#allocation10], 4
      %s76 = int_to_ptr.vmem [resolvable:$true] %s75
      %81 = dma.hbm_to_vmem [thread:$0]  %s7, 1024, %s76, [#allocation9], 64, 64, 4
    $region33: #{tpu_custom_call.1} parent=1 // pred_fallthru
      _
    // Predicated region
    $region34: #{tpu_custom_call.1} parent=1 // pred_check
      _
    $region35: #{tpu_custom_call.1} parent=1 // pred_check_branch
      %83 = sbr.rel (0) target = $region37
    $region36: #{tpu_custom_call.1} parent=1 // pred_region
      _
    $region37: #{tpu_custom_call.1} parent=1 // pred_fallthru
      _
    // Predicated region
    $region38: #{tpu_custom_call.1} parent=1 // pred_check
      _
    $region39: #{tpu_custom_call.1} parent=1 // pred_check_branch
      %85 = sbr.rel (0) target = $region41
    $region40: #{tpu_custom_call.1} parent=1 // pred_region
      %86 = dma.done [#allocation3], 128
    $region41: #{tpu_custom_call.1} parent=1 // pred_fallthru
      _
    // Predicated region
    $region42: #{tpu_custom_call.1} parent=1 // pred_check
      _
    $region43: #{tpu_custom_call.1} parent=1 // pred_check_branch
      %88 = sbr.rel (0) target = $region45
    $region44: #{tpu_custom_call.1} parent=1 // pred_region
      %89 = dma.done [#allocation6], 1024
    $region45: #{tpu_custom_call.1} parent=1 // pred_fallthru
      _
    // Predicated region
    $region46: #{tpu_custom_call.1} parent=1 // pred_check
      _
    $region47: #{tpu_custom_call.1} parent=1 // pred_check_branch
      %91 = sbr.rel (0) target = $region49
    $region48: #{tpu_custom_call.1} parent=1 // pred_region
      %92 = dma.done [#allocation6], 1024
    $region49: #{tpu_custom_call.1} parent=1 // pred_fallthru
      _
    // Predicated region
    $region50: #{tpu_custom_call.1} parent=1 // pred_check
      _
    $region51: #{tpu_custom_call.1} parent=1 // pred_check_branch
      %94 = sbr.rel (0) target = $region53
    $region52: #{tpu_custom_call.1} parent=1 // pred_region
      %95 = dma.done [#allocation9], 1024
    $region53: #{tpu_custom_call.1} parent=1 // pred_fallthru
      _
    // Predicated region
    $region54: #{tpu_custom_call.1} parent=1 // pred_check
      _
    $region55: #{tpu_custom_call.1} parent=1 // pred_check_branch
      %97 = sbr.rel (0) target = $region57
    $region56: #{tpu_custom_call.1} parent=1 // pred_region
      %98 = dma.done [#allocation9], 1024
    $region57: #{tpu_custom_call.1} parent=1 // pred_fallthru
      _
    %v100 = vld [vmem:[#allocation2] sm:$0xff]
    %v101 = vld [vmem:[#allocation5] sm:$0xf]
    %v102 = vld [vmem:[#allocation5 + $0x4] sm:$0xf]
    %v103 = vld [vmem:[#allocation5 + $0x8] sm:$0xf]
    %v104 = vld [vmem:[#allocation5 + $0xc] sm:$0xf]
    %v105 = vld [vmem:[#allocation5 + $0x10] sm:$0xf]
    %v106 = vld [vmem:[#allocation5 + $0x14] sm:$0xf]
    %v107 = vld [vmem:[#allocation5 + $0x18] sm:$0xf]
    %v108 = vld [vmem:[#allocation5 + $0x1c] sm:$0xf]
    %v109 = vld [vmem:[#allocation5 + $0x20] sm:$0xf]
    %v110 = vld [vmem:[#allocation5 + $0x24] sm:$0xf]
    %v111 = vld [vmem:[#allocation5 + $0x28] sm:$0xf]
    %v112 = vld [vmem:[#allocation5 + $0x2c] sm:$0xf]
    %v113 = vld [vmem:[#allocation5 + $0x30] sm:$0xf]
    %v114 = vld [vmem:[#allocation5 + $0x34] sm:$0xf]
    %v115 = vld [vmem:[#allocation5 + $0x38] sm:$0xf]
    %v116 = vld [vmem:[#allocation5 + $0x3c] sm:$0xf]
    %v117 = vld [vmem:[%s2] sm:$0x1]
    %v118 = vpack.c.bf16 %v100, %v100
    %v120 = vlaneseq
    %v121 = vshrl.u32 %v120, 7
    %v122 = vsub.s32 0, %v121
    %v123 = vrot.slane %v117, %v122
    %v141 = vunpack.c.l.b16 %v101
    %v142 = vunpack.c.l.b16 %v102
    %v143 = vunpack.c.l.b16 %v103
    %v144 = vunpack.c.l.b16 %v104
    %v145 = vunpack.c.l.b16 %v105
    %v146 = vunpack.c.l.b16 %v106
    %v147 = vunpack.c.l.b16 %v107
    %v148 = vunpack.c.l.b16 %v108
    %v149 = vunpack.c.l.b16 %v109
    %v150 = vunpack.c.l.b16 %v110
    %v151 = vunpack.c.l.b16 %v111
    %v152 = vunpack.c.l.b16 %v112
    %v153 = vunpack.c.l.b16 %v113
    %v154 = vunpack.c.l.b16 %v114
    %v155 = vunpack.c.l.b16 %v115
    %v156 = vunpack.c.l.b16 %v116
    %v157 = vpack.c.b16 %v142, %v141
    %v158 = vpack.c.b16 %v144, %v143
    %v159 = vpack.c.b16 %v146, %v145
    %v160 = vpack.c.b16 %v148, %v147
    %v161 = vpack.c.b16 %v150, %v149
    %v162 = vpack.c.b16 %v152, %v151
    %v163 = vpack.c.b16 %v154, %v153
    %v164 = vpack.c.b16 %v156, %v155
    %173 = vmatprep.subr.bf16.mxu0 0
    %174 = vmatpush1.bf16.msra.mxu0 %v157
    %175 = vmatprep.subr.bf16.mxu0 0
    %176 = vmatpush1.bf16.msra.mxu0 %v158
    %177 = vmatprep.subr.bf16.mxu0 0
    %178 = vmatpush1.bf16.msra.mxu0 %v159
    %179 = vmatprep.subr.bf16.mxu0 0
    %180 = vmatpush1.bf16.msra.mxu0 %v160
    %181 = vmatprep.subr.bf16.mxu0 0
    %182 = vmatpush1.bf16.msra.mxu0 %v161
    %183 = vmatprep.subr.bf16.mxu0 0
    %184 = vmatpush1.bf16.msra.mxu0 %v162
    %185 = vmatprep.subr.bf16.mxu0 0
    %186 = vmatpush1.bf16.msra.mxu0 %v163
    %187 = vmatprep.subr.bf16.mxu0 0
    %188 = vmatpush1.bf16.msra.mxu0 %v164
    %189 = vmatprep.subr.bf16.mxu0 0
    %190 = vmatpush1.bf16.msra.mxu0 0
    %191 = vmatprep.subr.bf16.mxu0 0
    %192 = vmatpush1.bf16.msra.mxu0 0
    %193 = vmatprep.subr.bf16.mxu0 0
    %194 = vmatpush1.bf16.msra.mxu0 0
    %195 = vmatprep.subr.bf16.mxu0 0
    %196 = vmatpush1.bf16.msra.mxu0 0
    %197 = vmatprep.subr.bf16.mxu0 0
    %198 = vmatpush1.bf16.msra.mxu0 0
    %199 = vmatprep.subr.bf16.mxu0 0
    %200 = vmatpush1.bf16.msra.mxu0 0
    %201 = vmatprep.subr.bf16.mxu0 0
    %202 = vmatpush1.bf16.msra.mxu0 0
    %203 = vmatprep.subr.bf16.mxu0 0
    %204 = vmatpush1.bf16.msra.mxu0 0
    %205 = vmatprep.mubr.bf16.mxu0 0
    %206 = vmatmul.mubr.bf16.gmra.mrb[0].mxu0 %v118
    %v207 = vpop.f32.mrb[0].mxu0
    %v208 = vadd.f32 %v123, %v207
    %v209 = vpop.f32.mrb[0].mxu0
    %v210 = vpop.f32.mrb[0].mxu0
    %v211 = vpop.f32.mrb[0].mxu0
    %212 = vdwg.mxu0
    %v213 = vmax.f32 %v208, 0.0
    %v214 = vld [vmem:[#allocation7] sm:$0xf]
    %v215 = vld [vmem:[#allocation7 + $0x4] sm:$0xf]
    %v216 = vld [vmem:[#allocation7 + $0x8] sm:$0xf]
    %v217 = vld [vmem:[#allocation7 + $0xc] sm:$0xf]
    %v218 = vld [vmem:[#allocation7 + $0x10] sm:$0xf]
    %v219 = vld [vmem:[#allocation7 + $0x14] sm:$0xf]
    %v220 = vld [vmem:[#allocation7 + $0x18] sm:$0xf]
    %v221 = vld [vmem:[#allocation7 + $0x1c] sm:$0xf]
    %v222 = vld [vmem:[#allocation7 + $0x20] sm:$0xf]
    %v223 = vld [vmem:[#allocation7 + $0x24] sm:$0xf]
    %v224 = vld [vmem:[#allocation7 + $0x28] sm:$0xf]
    %v225 = vld [vmem:[#allocation7 + $0x2c] sm:$0xf]
    %v226 = vld [vmem:[#allocation7 + $0x30] sm:$0xf]
    %v227 = vld [vmem:[#allocation7 + $0x34] sm:$0xf]
    %v228 = vld [vmem:[#allocation7 + $0x38] sm:$0xf]
    %v229 = vld [vmem:[#allocation7 + $0x3c] sm:$0xf]
    %v230 = vld [vmem:[%s4] sm:$0x1]
    %v231 = vpack.c.bf16 %v213, %v213
    %v233 = vlaneseq
    %v234 = vshrl.u32 %v233, 7
    %v235 = vsub.s32 0, %v234
    %v236 = vrot.slane %v230, %v235
    %v254 = vunpack.c.l.b16 %v214
    %v255 = vunpack.c.l.b16 %v215
    %v256 = vunpack.c.l.b16 %v216
    %v257 = vunpack.c.l.b16 %v217
    %v258 = vunpack.c.l.b16 %v218
    %v259 = vunpack.c.l.b16 %v219
    %v260 = vunpack.c.l.b16 %v220
    %v261 = vunpack.c.l.b16 %v221
    %v262 = vunpack.c.l.b16 %v222
    %v263 = vunpack.c.l.b16 %v223
    %v264 = vunpack.c.l.b16 %v224
    %v265 = vunpack.c.l.b16 %v225
    %v266 = vunpack.c.l.b16 %v226
    %v267 = vunpack.c.l.b16 %v227
    %v268 = vunpack.c.l.b16 %v228
    %v269 = vunpack.c.l.b16 %v229
    %v270 = vpack.c.b16 %v255, %v254
    %v271 = vpack.c.b16 %v257, %v256
    %v272 = vpack.c.b16 %v259, %v258
    %v273 = vpack.c.b16 %v261, %v260
    %v274 = vpack.c.b16 %v263, %v262
    %v275 = vpack.c.b16 %v265, %v264
    %v276 = vpack.c.b16 %v267, %v266
    %v277 = vpack.c.b16 %v269, %v268
    %286 = vmatprep.subr.bf16.mxu0 0
    %287 = vmatpush1.bf16.msra.mxu0 %v270
    %288 = vmatprep.subr.bf16.mxu0 0
    %289 = vmatpush1.bf16.msra.mxu0 %v271
    %290 = vmatprep.subr.bf16.mxu0 0
    %291 = vmatpush1.bf16.msra.mxu0 %v272
    %292 = vmatprep.subr.bf16.mxu0 0
    %293 = vmatpush1.bf16.msra.mxu0 %v273
    %294 = vmatprep.subr.bf16.mxu0 0
    %295 = vmatpush1.bf16.msra.mxu0 %v274
    %296 = vmatprep.subr.bf16.mxu0 0
    %297 = vmatpush1.bf16.msra.mxu0 %v275
    %298 = vmatprep.subr.bf16.mxu0 0
    %299 = vmatpush1.bf16.msra.mxu0 %v276
    %300 = vmatprep.subr.bf16.mxu0 0
    %301 = vmatpush1.bf16.msra.mxu0 %v277
    %302 = vmatprep.subr.bf16.mxu0 0
    %303 = vmatpush1.bf16.msra.mxu0 0
    %304 = vmatprep.subr.bf16.mxu0 0
    %305 = vmatpush1.bf16.msra.mxu0 0
    %306 = vmatprep.subr.bf16.mxu0 0
    %307 = vmatpush1.bf16.msra.mxu0 0
    %308 = vmatprep.subr.bf16.mxu0 0
    %309 = vmatpush1.bf16.msra.mxu0 0
    %310 = vmatprep.subr.bf16.mxu0 0
    %311 = vmatpush1.bf16.msra.mxu0 0
    %312 = vmatprep.subr.bf16.mxu0 0
    %313 = vmatpush1.bf16.msra.mxu0 0
    %314 = vmatprep.subr.bf16.mxu0 0
    %315 = vmatpush1.bf16.msra.mxu0 0
    %316 = vmatprep.subr.bf16.mxu0 0
    %317 = vmatpush1.bf16.msra.mxu0 0
    %318 = vmatprep.mubr.bf16.mxu0 0
    %319 = vmatmul.mubr.bf16.gmra.mrb[0].mxu0 %v231
    %v320 = vpop.f32.mrb[0].mxu0
    %v321 = vadd.f32 %v236, %v320
    %v322 = vpop.f32.mrb[0].mxu0
    %v323 = vpop.f32.mrb[0].mxu0
    %v324 = vpop.f32.mrb[0].mxu0
    %325 = vdwg.mxu0
    %v326 = vtanh.pop %v321
    %v327 = vld [vmem:[#allocation8] sm:$0xf]
    %v328 = vld [vmem:[#allocation8 + $0x4] sm:$0xf]
    %v329 = vld [vmem:[#allocation8 + $0x8] sm:$0xf]
    %v330 = vld [vmem:[#allocation8 + $0xc] sm:$0xf]
    %v331 = vld [vmem:[#allocation8 + $0x10] sm:$0xf]
    %v332 = vld [vmem:[#allocation8 + $0x14] sm:$0xf]
    %v333 = vld [vmem:[#allocation8 + $0x18] sm:$0xf]
    %v334 = vld [vmem:[#allocation8 + $0x1c] sm:$0xf]
    %v335 = vld [vmem:[#allocation8 + $0x20] sm:$0xf]
    %v336 = vld [vmem:[#allocation8 + $0x24] sm:$0xf]
    %v337 = vld [vmem:[#allocation8 + $0x28] sm:$0xf]
    %v338 = vld [vmem:[#allocation8 + $0x2c] sm:$0xf]
    %v339 = vld [vmem:[#allocation8 + $0x30] sm:$0xf]
    %v340 = vld [vmem:[#allocation8 + $0x34] sm:$0xf]
    %v341 = vld [vmem:[#allocation8 + $0x38] sm:$0xf]
    %v342 = vld [vmem:[#allocation8 + $0x3c] sm:$0xf]
    %v343 = vld [vmem:[%s6] sm:$0x1]
    %v344 = vpack.c.bf16 %v326, %v326
    %v346 = vlaneseq
    %v347 = vshrl.u32 %v346, 7
    %v348 = vsub.s32 0, %v347
    %v349 = vrot.slane %v343, %v348
    %v367 = vunpack.c.l.b16 %v327
    %v368 = vunpack.c.l.b16 %v328
    %v369 = vunpack.c.l.b16 %v329
    %v370 = vunpack.c.l.b16 %v330
    %v371 = vunpack.c.l.b16 %v331
    %v372 = vunpack.c.l.b16 %v332
    %v373 = vunpack.c.l.b16 %v333
    %v374 = vunpack.c.l.b16 %v334
    %v375 = vunpack.c.l.b16 %v335
    %v376 = vunpack.c.l.b16 %v336
    %v377 = vunpack.c.l.b16 %v337
    %v378 = vunpack.c.l.b16 %v338
    %v379 = vunpack.c.l.b16 %v339
    %v380 = vunpack.c.l.b16 %v340
    %v381 = vunpack.c.l.b16 %v341
    %v382 = vunpack.c.l.b16 %v342
    %v383 = vpack.c.b16 %v368, %v367
    %v384 = vpack.c.b16 %v370, %v369
    %v385 = vpack.c.b16 %v372, %v371
    %v386 = vpack.c.b16 %v374, %v373
    %v387 = vpack.c.b16 %v376, %v375
    %v388 = vpack.c.b16 %v378, %v377
    %v389 = vpack.c.b16 %v380, %v379
    %v390 = vpack.c.b16 %v382, %v381
    %399 = vmatprep.subr.bf16.mxu0 0
    %400 = vmatpush1.bf16.msra.mxu0 %v383
    %401 = vmatprep.subr.bf16.mxu0 0
    %402 = vmatpush1.bf16.msra.mxu0 %v384
    %403 = vmatprep.subr.bf16.mxu0 0
    %404 = vmatpush1.bf16.msra.mxu0 %v385
    %405 = vmatprep.subr.bf16.mxu0 0
    %406 = vmatpush1.bf16.msra.mxu0 %v386
    %407 = vmatprep.subr.bf16.mxu0 0
    %408 = vmatpush1.bf16.msra.mxu0 %v387
    %409 = vmatprep.subr.bf16.mxu0 0
    %410 = vmatpush1.bf16.msra.mxu0 %v388
    %411 = vmatprep.subr.bf16.mxu0 0
    %412 = vmatpush1.bf16.msra.mxu0 %v389
    %413 = vmatprep.subr.bf16.mxu0 0
    %414 = vmatpush1.bf16.msra.mxu0 %v390
    %415 = vmatprep.subr.bf16.mxu0 0
    %416 = vmatpush1.bf16.msra.mxu0 0
    %417 = vmatprep.subr.bf16.mxu0 0
    %418 = vmatpush1.bf16.msra.mxu0 0
    %419 = vmatprep.subr.bf16.mxu0 0
    %420 = vmatpush1.bf16.msra.mxu0 0
    %421 = vmatprep.subr.bf16.mxu0 0
    %422 = vmatpush1.bf16.msra.mxu0 0
    %423 = vmatprep.subr.bf16.mxu0 0
    %424 = vmatpush1.bf16.msra.mxu0 0
    %425 = vmatprep.subr.bf16.mxu0 0
    %426 = vmatpush1.bf16.msra.mxu0 0
    %427 = vmatprep.subr.bf16.mxu0 0
    %428 = vmatpush1.bf16.msra.mxu0 0
    %429 = vmatprep.subr.bf16.mxu0 0
    %430 = vmatpush1.bf16.msra.mxu0 0
    %431 = vmatprep.mubr.bf16.mxu0 0
    %432 = vmatmul.mubr.bf16.gmra.mrb[0].mxu0 %v344
    %v433 = vpop.f32.mrb[0].mxu0
    %v434 = vadd.f32 %v349, %v433
    %v435 = vpop.f32.mrb[0].mxu0
    %v436 = vpop.f32.mrb[0].mxu0
    %v437 = vpop.f32.mrb[0].mxu0
    %438 = vdwg.mxu0
    %v439 = vxor.u32 %v434, 2147483648
    %v440 = vmul.f32 %v439, 1.442695
    %v441 = vpow.pop %v440
    %v442 = vadd.f32 %v441, 1.0
    %v443 = vrcp.pop %v442
    %v444 = vmul.f32 1.0, %v443
    %v445 = vld [vmem:[#allocation10] sm:$0xf]
    %v446 = vld [vmem:[#allocation10 + $0x4] sm:$0xf]
    %v447 = vld [vmem:[#allocation10 + $0x8] sm:$0xf]
    %v448 = vld [vmem:[#allocation10 + $0xc] sm:$0xf]
    %v449 = vld [vmem:[#allocation10 + $0x10] sm:$0xf]
    %v450 = vld [vmem:[#allocation10 + $0x14] sm:$0xf]
    %v451 = vld [vmem:[#allocation10 + $0x18] sm:$0xf]
    %v452 = vld [vmem:[#allocation10 + $0x1c] sm:$0xf]
    %v453 = vld [vmem:[#allocation10 + $0x20] sm:$0xf]
    %v454 = vld [vmem:[#allocation10 + $0x24] sm:$0xf]
    %v455 = vld [vmem:[#allocation10 + $0x28] sm:$0xf]
    %v456 = vld [vmem:[#allocation10 + $0x2c] sm:$0xf]
    %v457 = vld [vmem:[#allocation10 + $0x30] sm:$0xf]
    %v458 = vld [vmem:[#allocation10 + $0x34] sm:$0xf]
    %v459 = vld [vmem:[#allocation10 + $0x38] sm:$0xf]
    %v460 = vld [vmem:[#allocation10 + $0x3c] sm:$0xf]
    %v461 = vld [vmem:[%s8] sm:$0x1]
    %v462 = vpack.c.bf16 %v444, %v444
    %v464 = vlaneseq
    %v465 = vshrl.u32 %v464, 7
    %v466 = vsub.s32 0, %v465
    %v467 = vrot.slane %v461, %v466
    %v485 = vunpack.c.l.b16 %v445
    %v486 = vunpack.c.l.b16 %v446
    %v487 = vunpack.c.l.b16 %v447
    %v488 = vunpack.c.l.b16 %v448
    %v489 = vunpack.c.l.b16 %v449
    %v490 = vunpack.c.l.b16 %v450
    %v491 = vunpack.c.l.b16 %v451
    %v492 = vunpack.c.l.b16 %v452
    %v493 = vunpack.c.l.b16 %v453
    %v494 = vunpack.c.l.b16 %v454
    %v495 = vunpack.c.l.b16 %v455
    %v496 = vunpack.c.l.b16 %v456
    %v497 = vunpack.c.l.b16 %v457
    %v498 = vunpack.c.l.b16 %v458
    %v499 = vunpack.c.l.b16 %v459
    %v500 = vunpack.c.l.b16 %v460
    %v501 = vpack.c.b16 %v486, %v485
    %v502 = vpack.c.b16 %v488, %v487
    %v503 = vpack.c.b16 %v490, %v489
    %v504 = vpack.c.b16 %v492, %v491
    %v505 = vpack.c.b16 %v494, %v493
    %v506 = vpack.c.b16 %v496, %v495
    %v507 = vpack.c.b16 %v498, %v497
    %v508 = vpack.c.b16 %v500, %v499
    %517 = vmatprep.subr.bf16.mxu0 0
    %518 = vmatpush1.bf16.msra.mxu0 %v501
    %519 = vmatprep.subr.bf16.mxu0 0
    %520 = vmatpush1.bf16.msra.mxu0 %v502
    %521 = vmatprep.subr.bf16.mxu0 0
    %522 = vmatpush1.bf16.msra.mxu0 %v503
    %523 = vmatprep.subr.bf16.mxu0 0
    %524 = vmatpush1.bf16.msra.mxu0 %v504
    %525 = vmatprep.subr.bf16.mxu0 0
    %526 = vmatpush1.bf16.msra.mxu0 %v505
    %527 = vmatprep.subr.bf16.mxu0 0
    %528 = vmatpush1.bf16.msra.mxu0 %v506
    %529 = vmatprep.subr.bf16.mxu0 0
    %530 = vmatpush1.bf16.msra.mxu0 %v507
    %531 = vmatprep.subr.bf16.mxu0 0
    %532 = vmatpush1.bf16.msra.mxu0 %v508
    %533 = vmatprep.subr.bf16.mxu0 0
    %534 = vmatpush1.bf16.msra.mxu0 0
    %535 = vmatprep.subr.bf16.mxu0 0
    %536 = vmatpush1.bf16.msra.mxu0 0
    %537 = vmatprep.subr.bf16.mxu0 0
    %538 = vmatpush1.bf16.msra.mxu0 0
    %539 = vmatprep.subr.bf16.mxu0 0
    %540 = vmatpush1.bf16.msra.mxu0 0
    %541 = vmatprep.subr.bf16.mxu0 0
    %542 = vmatpush1.bf16.msra.mxu0 0
    %543 = vmatprep.subr.bf16.mxu0 0
    %544 = vmatpush1.bf16.msra.mxu0 0
    %545 = vmatprep.subr.bf16.mxu0 0
    %546 = vmatpush1.bf16.msra.mxu0 0
    %547 = vmatprep.subr.bf16.mxu0 0
    %548 = vmatpush1.bf16.msra.mxu0 0
    %549 = vmatprep.mubr.bf16.mxu0 0
    %550 = vmatmul.mubr.bf16.gmra.mrb[0].mxu0 %v462
    %v551 = vpop.f32.mrb[0].mxu0
    %v552 = vadd.f32 %v467, %v551
    %v553 = vpop.f32.mrb[0].mxu0
    %v554 = vpop.f32.mrb[0].mxu0
    %v555 = vpop.f32.mrb[0].mxu0
    %556 = vdwg.mxu0
    %557 = vst [vmem:[#allocation11] sm:$0xff] %v552
    // Predicated region
    $region58: #{tpu_custom_call.1} parent=1 // pred_check
      _
    $region59: #{tpu_custom_call.1} parent=1 // pred_check_branch
      %559 = sbr.rel (0) target = $region61
    $region60: #{tpu_custom_call.1} parent=1 // pred_region
      %s561 = ssub.s32 128, 128
      %562 = vsyncadd [#allocation4], %s561
      %s564 = sshll.u32 [#allocation11], 4
      %s565 = int_to_ptr.vmem [resolvable:$true] %s564
      %567 = dma.vmem_to_hbm [thread:$0]  %s565, 128, %s9, [#allocation4]
    $region61: #{tpu_custom_call.1} parent=1 // pred_fallthru
      _
    // Predicated region
    $region62: #{tpu_custom_call.1} parent=1 // pred_check
      _
    $region63: #{tpu_custom_call.1} parent=1 // pred_check_branch
      %569 = sbr.rel (0) target = $region65
    $region64: #{tpu_custom_call.1} parent=1 // pred_region
      %570 = dma.done [#allocation4], 128
    $region65: #{tpu_custom_call.1} parent=1 // pred_fallthru
      _
    %571 = vsyncpa [#allocation3], 1
    %572 = vsyncpa [#allocation6], 1
    %573 = vsyncpa [#allocation9], 1
    %574 = vsyncpa [#allocation4], 1

</llo_original>
